<compile_context>
chip_gen: v6e
topology: v6e:2x2x1
jax: 0.10.0
libtpu: 0.0.40
codegen_flags: <defaults>
</compile_context>

<pallas_src>
import functools

import jax
import jax.numpy as jnp
from jax.experimental import pallas as pl
from jax.experimental.pallas import tpu as pltpu


def _lstm_kernel(xproj_ref, wh_ref, out_ref, h_scr, c_scr, *, hidden_size, chunk):
    """One grid step = one batch block x one chunk of `chunk` timesteps.

    xproj_ref : (chunk, B_blk, 4H)   precomputed x_t @ Wx + b (f32 or bf16 storage)
    wh_ref    : (H, 4H)              resident recurrent weight (f32)
    out_ref   : (1, B_blk, chunk*H)  lane-dense packed hidden states for this chunk
    h_scr/c_scr : (B_blk, H) f32     recurrent state carried across chunks
    """
    chunk_idx = pl.program_id(1)  # time-chunk axis (axis 0 is the batch-block axis)

    # Zero initial states (matches set_initial_states(None, batch_size)) at the
    # start of every batch block's time walk.
    @pl.when(chunk_idx == 0)
    def _():
        h_scr[...] = jnp.zeros_like(h_scr)
        c_scr[...] = jnp.zeros_like(c_scr)

    wh = wh_ref[...]
    H = hidden_size

    h = h_scr[...]
    c = c_scr[...]
    hs = []

    # Static unroll over the chunk: state stays in vregs between steps.
    # (For large B*4H, switch to a partially-unrolled fori_loop to bound vreg
    #  pressure; full unroll is correct and fastest at these sizes.)
    for t in range(chunk):
        x_t = xproj_ref[t].astype(jnp.float32)  # upcast bf16 storage on load
        # Only the recurrent matmul is on the serial critical path (f32 MXU).
        gates = x_t + jnp.dot(h, wh, preferred_element_type=jnp.float32)  # (B_blk, 4H)

        if 4 * H <= 128:
            # Two full-vreg EUP passes, then lane-slice (better than 4
            # partial-lane transcendental calls when gate slices are < 128 lanes).
            sig = jax.nn.sigmoid(gates)
            tah = jnp.tanh(gates)
            i_gate = sig[:, 0 * H:1 * H]
            f_gate = sig[:, 1 * H:2 * H]
            g_gate = tah[:, 2 * H:3 * H]
            o_gate = sig[:, 3 * H:4 * H]
        else:
            i_gate = jax.nn.sigmoid(gates[:, 0 * H:1 * H])
            f_gate = jax.nn.sigmoid(gates[:, 1 * H:2 * H])
            g_gate = jnp.tanh(gates[:, 2 * H:3 * H])
            o_gate = jax.nn.sigmoid(gates[:, 3 * H:4 * H])

        c = f_gate * c + i_gate * g_gate
        h = o_gate * jnp.tanh(c)
        hs.append(h)

    # NOTE: padded trailing timesteps (T_pad > T) update h/c with padded-input
    # driven values; harmless because only the sliced hidden sequence is
    # returned (return_states=False).  Guard with a global-step mask before
    # ever returning final (h, c).
    h_scr[...] = h
    c_scr[...] = c

    # One lane-dense store of the whole chunk: (B_blk, chunk*H) instead of
    # `chunk` masked (B_blk, H) stores.
    out_ref[0] = jnp.concatenate(hs, axis=-1).astype(out_ref.dtype)


def generic_lstm_pallas(inputs_btd, wx, wh, b, *, time_chunk=None,
                        num_batch_blocks=1, xproj_dtype=jnp.float32):
    """GenericLSTM forward (return_states=False, zero initial states).

    inputs_btd : (B, T, D_in) float32
    wx : (D_in, 4H), wh : (H, 4H), b : (4H,)   gates packed [i | f | g | o]
    num_batch_blocks : leading "parallel" grid axis; set 2 on v7x for large B.
    xproj_dtype : storage dtype of the hoisted input projection in HBM
                  (bf16 halves the dominant streamed operand; math stays f32).
    Returns the hidden sequence (B, T, H) float32.
    """
    B, T, D_in = inputs_btd.shape
    H = wh.shape[0]
    G = 4 * H
    assert wx.shape == (D_in, G)
    assert wh.shape == (H, G)

    itemsize = jnp.dtype(xproj_dtype).itemsize

    # --- batch blocking (sublane-aligned; feeds the MXU M dimension) --------
    B_blk = -(-B // num_batch_blocks)          # ceil
    B_blk = ((B_blk + 7) // 8) * 8             # sublane multiple of 8
    B_pad = B_blk * num_batch_blocks

    # --- time chunk from a VMEM budget --------------------------------------
    if time_chunk is None:
        budget = 16 * 1024 * 1024  # conservative: fits v5e/v6e/v7x scoped VMEM
        per_step = 2 * B_blk * G * itemsize + 2 * B_blk * H * 4  # dbl-buffered in+out
        time_chunk = int(max(1, min(T, 16, budget // max(per_step, 1))))
    n_chunks = pl.cdiv(T, time_chunk)
    T_pad = n_chunks * time_chunk

    # --- pad the RAW input (not the 4x larger xproj) -------------------------
    x = inputs_btd.astype(jnp.float32)
    if T_pad != T or B_pad != B:
        x = jnp.pad(x, ((0, B_pad - B), (0, T_pad - T), (0, 0)))

    # Hoisted input projection for ALL timesteps, emitted time-major with the
    # bias folded in.  f32 x f32 matmul (no bf16 dot anywhere).
    xproj = jnp.einsum(
        "btd,dg->tbg", x, wx.astype(jnp.float32),
        preferred_element_type=jnp.float32,
    ) + b.reshape(1, 1, G).astype(jnp.float32)
    xproj = xproj.astype(xproj_dtype)          # (T_pad, B_pad, 4H) storage dtype

    wh_f32 = wh.astype(jnp.float32)

    kernel = functools.partial(_lstm_kernel, hidden_size=H, chunk=time_chunk)

    # --- explicit VMEM accounting --------------------------------------------
    xbytes = time_chunk * B_blk * G * itemsize
    obytes = B_blk * time_chunk * H * 4
    wbytes = H * G * 4
    sbytes = 2 * B_blk * H * 4
    vmem_needed = 2 * (xbytes + obytes) + 2 * wbytes + sbytes
    vmem_limit = int(min(max(2 * vmem_needed, 32 * 1024 * 1024), 64 * 1024 * 1024))

    cost = pl.CostEstimate(
        flops=int(2 * T_pad * B_pad * H * G),              # recurrent matmuls
        transcendentals=int(5 * T_pad * B_pad * H),        # 3 sigmoid + 2 tanh
        bytes_accessed=int(T_pad * B_pad * G * itemsize    # xproj stream
                           + T_pad * B_pad * H * 4         # hidden sequence
                           + H * G * 4),                   # Wh
    )

    out = pl.pallas_call(
        kernel,
        out_shape=jax.ShapeDtypeStruct((n_chunks, B_pad, time_chunk * H), jnp.float32),
        grid_spec=pltpu.PrefetchScalarGridSpec(
            num_scalar_prefetch=0,
            grid=(num_batch_blocks, n_chunks),
            in_specs=[
                # One chunk of precomputed gate inputs per grid step.
                pl.BlockSpec((time_chunk, B_blk, G), lambda bb, c: (c, bb, 0)),
                # Recurrent weight, resident across the whole grid.
                pl.BlockSpec((H, G), lambda bb, c: (0, 0)),
            ],
            # Lane-dense packed output: one (B_blk, chunk*H) slab per grid step.
            out_specs=pl.BlockSpec((1, B_blk, time_chunk * H), lambda bb, c: (c, bb, 0)),
            scratch_shapes=[
                pltpu.VMEM((B_blk, H), jnp.float32),  # hidden state (f32)
                pltpu.VMEM((B_blk, H), jnp.float32),  # context state (f32)
            ],
        ),
        compiler_params=pltpu.CompilerParams(
            # Batch blocks are independent (megacore-shardable); time chunks
            # carry the recurrence and must run sequentially.
            dimension_semantics=("parallel", "arbitrary"),
            vmem_limit_bytes=vmem_limit,
        ),
        cost_estimate=cost,
    )(xproj, wh_f32)

    # (n_chunks, B_pad, chunk*H) -> (B, T, H)
    out = out.reshape(n_chunks, B_pad, time_chunk, H)
    out = jnp.transpose(out, (1, 0, 2, 3)).reshape(B_pad, T_pad, H)
    return out[:B, :T]


def generic_lstm_reference(inputs_btd, wx, wh, b):
    """Pure-JAX reference mirroring GenericLSTM.forward with linear gate operators."""
    B, T, D_in = inputs_btd.shape
    H = wh.shape[0]
    h = jnp.zeros((B, H), jnp.float32)
    c = jnp.zeros((B, H), jnp.float32)

    def step(carry, x_t):
        h, c = carry
        gates = x_t @ wx + h @ wh + b
        i = jax.nn.sigmoid(gates[:, 0 * H:1 * H])
        f = jax.nn.sigmoid(gates[:, 1 * H:2 * H])
        g = jnp.tanh(gates[:, 2 * H:3 * H])
        o = jax.nn.sigmoid(gates[:, 3 * H:4 * H])
        c = f * c + i * g
        h = o * jnp.tanh(c)
        return (h, c), h

    (_, _), hs = jax.lax.scan(step, (h, c), jnp.transpose(inputs_btd, (1, 0, 2)))
    return jnp.transpose(hs, (1, 0, 2))


if __name__ == "__main__":
    # Small shapes: batch=8, seq=8, n_input_state_variables=16, n_output=32.
    B, T, D_in, H = 8, 8, 16, 32

    key = jax.random.PRNGKey(0)
    k_x, k_x2, k_wx, k_wh, k_b = jax.random.split(key, 5)

    # Deterministic "Linear-style" init (uniform in +/- 1/sqrt(fan_in)),
    # gates packed column-wise as [input | forget | context | output].
    bound_x = 1.0 / jnp.sqrt(D_in)
    bound_h = 1.0 / jnp.sqrt(H)
    wx = jax.random.uniform(k_wx, (D_in, 4 * H), jnp.float32, -bound_x, bound_x)
    wh = jax.random.uniform(k_wh, (H, 4 * H), jnp.float32, -bound_h, bound_h)
    b = jax.random.uniform(k_b, (4 * H,), jnp.float32, -bound_h, bound_h)

    x = jax.random.normal(k_x, (B, T, D_in), jnp.float32)
    ref = generic_lstm_reference(x, wx, wh, b)

    # 1) Default f32 path (single chunk): must match the reference tightly.
    out = generic_lstm_pallas(x, wx, wh, b)
    out = jax.block_until_ready(out)
    assert out.shape == (B, T, H)
    assert jnp.allclose(out, ref, atol=1e-4, rtol=1e-4), "mismatch vs reference (f32)"

    # 2) Multi-chunk + time padding (chunk=3 -> 3 chunks, 1 padded step):
    #    exercises the VMEM-carried recurrent state across grid steps.
    out_mc = generic_lstm_pallas(x, wx, wh, b, time_chunk=3)
    out_mc = jax.block_until_ready(out_mc)
    assert out_mc.shape == (B, T, H)
    assert jnp.allclose(out_mc, ref, atol=1e-4, rtol=1e-4), "mismatch (multi-chunk)"

    # 3) bf16 HBM storage of the hoisted input projection (math stays f32):
    #    loose check only (storage rounding), no bf16 matmul anywhere.
    out_bf16 = generic_lstm_pallas(x, wx, wh, b, xproj_dtype=jnp.bfloat16)
    out_bf16 = jax.block_until_ready(out_bf16)
    assert out_bf16.shape == (B, T, H)
    assert bool(jnp.all(jnp.isfinite(out_bf16)))
    assert jnp.allclose(out_bf16, ref, atol=1e-1, rtol=1e-1), "bf16-storage path diverged"

    # 4) Batch split across two blocks (v7x megacore-style "parallel" axis),
    #    with T not a multiple of the chunk.
    B2, T2 = 16, 12
    x2 = jax.random.normal(k_x2, (B2, T2, D_in), jnp.float32)
    ref2 = generic_lstm_reference(x2, wx, wh, b)
    out2 = generic_lstm_pallas(x2, wx, wh, b, time_chunk=8, num_batch_blocks=2)
    out2 = jax.block_until_ready(out2)
    assert out2.shape == (B2, T2, H)
    assert jnp.allclose(out2, ref2, atol=1e-4, rtol=1e-4), "mismatch (batch-split)"

    print("KERNEL_OK")
</pallas_src>

<mosaic_0001>
module attributes {stable_mosaic.version = 11 : i64} {
  func.func @_lstm_kernel(%arg0: i32, %arg1: i32, %arg2: memref<8x8x128xf32, #tpu.memory_space<vmem>>, %arg3: memref<32x128xf32, #tpu.memory_space<vmem>>, %arg4: memref<1x8x256xf32, #tpu.memory_space<vmem>>, %arg5: memref<8x32xf32, #tpu.memory_space<vmem>>, %arg6: memref<8x32xf32, #tpu.memory_space<vmem>>) attributes {dimension_semantics = [#tpu.dimension_semantics<parallel>, #tpu.dimension_semantics<arbitrary>], iteration_bounds = array<i64: 1, 1>, scalar_prefetch = 0 : i64, scratch_operands = 2 : i64, tpu.core_type = #tpu.core_type<tc>, window_params = [{transform_indices = @transform_0, window_bounds = array<i64: 8, 8, 128>}, {pipeline_mode = #tpu.pipeline_mode<synchronous>, transform_indices = @transform_1, window_bounds = array<i64: 32, 128>}, {transform_indices = @transform_2, window_bounds = array<i64: 1, 8, 256>}]} {
    %c0_i32 = arith.constant 0 : i32
    %0 = arith.cmpi eq, %arg1, %c0_i32 : i32
    %1 = arith.extui %0 : i1 to i32
    %c0_i32_0 = arith.constant 0 : i32
    %2 = arith.cmpi ne, %1, %c0_i32_0 : i32
    scf.if %2 {
      %cst_45 = arith.constant 0.000000e+00 : f32
      %164 = vector.broadcast %cst_45 : f32 to vector<8x32xf32>
      %c0_46 = arith.constant 0 : index
      %c0_47 = arith.constant 0 : index
      %165 = vector.load %arg5[%c0_46, %c0_47] : memref<8x32xf32, #tpu.memory_space<vmem>>, vector<8x32xf32>
      tpu.vector_store %arg5[%c0_46, %c0_47], %164 {strides = array<i32>} : memref<8x32xf32, #tpu.memory_space<vmem>>, vector<8x32xf32>,
      %cst_48 = arith.constant 0.000000e+00 : f32
      %166 = vector.broadcast %cst_48 : f32 to vector<8x32xf32>
      %c0_49 = arith.constant 0 : index
      %c0_50 = arith.constant 0 : index
      %167 = vector.load %arg6[%c0_49, %c0_50] : memref<8x32xf32, #tpu.memory_space<vmem>>, vector<8x32xf32>
      tpu.vector_store %arg6[%c0_49, %c0_50], %166 {strides = array<i32>} : memref<8x32xf32, #tpu.memory_space<vmem>>, vector<8x32xf32>,
    } else {
    }
    %c0 = arith.constant 0 : index
    %c0_1 = arith.constant 0 : index
    %3 = vector.load %arg3[%c0, %c0_1] : memref<32x128xf32, #tpu.memory_space<vmem>>, vector<32x128xf32>
    %c0_2 = arith.constant 0 : index
    %c0_3 = arith.constant 0 : index
    %4 = vector.load %arg5[%c0_2, %c0_3] : memref<8x32xf32, #tpu.memory_space<vmem>>, vector<8x32xf32>
    %c0_4 = arith.constant 0 : index
    %c0_5 = arith.constant 0 : index
    %5 = vector.load %arg6[%c0_4, %c0_5] : memref<8x32xf32, #tpu.memory_space<vmem>>, vector<8x32xf32>
    %c0_6 = arith.constant 0 : index
    %c0_7 = arith.constant 0 : index
    %c0_8 = arith.constant 0 : index
    %6 = vector.load %arg2[%c0_6, %c0_7, %c0_8] : memref<8x8x128xf32, #tpu.memory_space<vmem>>, vector<1x8x128xf32>
    %7 = vector.shape_cast %6 : vector<1x8x128xf32> to vector<8x128xf32>
    %cst = arith.constant dense<0.000000e+00> : vector<8x128xf32>
    %8 = tpu.matmul %4, %3, %cst {dimension_numbers = #tpu.dot_dimension_numbers<[1], [0], [0], [1], [0, 0, 1, 1], [], []>} : vector<8x32xf32>, vector<32x128xf32>, vector<8x128xf32> -> vector<8x128xf32>
    %9 = arith.addf %7, %8 : vector<8x128xf32>
    %10 = arith.negf %9 : vector<8x128xf32>
    %11 = math.exp %10 : vector<8x128xf32>
    %cst_9 = arith.constant 1.000000e+00 : f32
    %12 = vector.broadcast %cst_9 : f32 to vector<8x128xf32>
    %13 = arith.addf %12, %11 : vector<8x128xf32>
    %14 = arith.divf %12, %13 : vector<8x128xf32>
    %15 = math.tanh %9 : vector<8x128xf32>
    %16 = vector.extract_strided_slice %14 {offsets = [0, 0], sizes = [8, 32], strides = [1, 1]} : vector<8x128xf32> to vector<8x32xf32>
    %17 = vector.extract_strided_slice %14 {offsets = [0, 32], sizes = [8, 32], strides = [1, 1]} : vector<8x128xf32> to vector<8x32xf32>
    %18 = vector.extract_strided_slice %15 {offsets = [0, 64], sizes = [8, 32], strides = [1, 1]} : vector<8x128xf32> to vector<8x32xf32>
    %19 = vector.extract_strided_slice %14 {offsets = [0, 96], sizes = [8, 32], strides = [1, 1]} : vector<8x128xf32> to vector<8x32xf32>
    %20 = arith.mulf %17, %5 : vector<8x32xf32>
    %21 = arith.mulf %16, %18 : vector<8x32xf32>
    %22 = arith.addf %20, %21 : vector<8x32xf32>
    %23 = math.tanh %22 : vector<8x32xf32>
    %24 = arith.mulf %19, %23 : vector<8x32xf32>
    %c1 = arith.constant 1 : index
    %c0_10 = arith.constant 0 : index
    %c0_11 = arith.constant 0 : index
    %25 = vector.load %arg2[%c1, %c0_10, %c0_11] : memref<8x8x128xf32, #tpu.memory_space<vmem>>, vector<1x8x128xf32>
    %26 = vector.shape_cast %25 : vector<1x8x128xf32> to vector<8x128xf32>
    %cst_12 = arith.constant dense<0.000000e+00> : vector<8x128xf32>
    %27 = tpu.matmul %24, %3, %cst_12 {dimension_numbers = #tpu.dot_dimension_numbers<[1], [0], [0], [1], [0, 0, 1, 1], [], []>} : vector<8x32xf32>, vector<32x128xf32>, vector<8x128xf32> -> vector<8x128xf32>
    %28 = arith.addf %26, %27 : vector<8x128xf32>
    %29 = arith.negf %28 : vector<8x128xf32>
    %30 = math.exp %29 : vector<8x128xf32>
    %cst_13 = arith.constant 1.000000e+00 : f32
    %31 = vector.broadcast %cst_13 : f32 to vector<8x128xf32>
    %32 = arith.addf %31, %30 : vector<8x128xf32>
    %33 = arith.divf %31, %32 : vector<8x128xf32>
    %34 = math.tanh %28 : vector<8x128xf32>
    %35 = vector.extract_strided_slice %33 {offsets = [0, 0], sizes = [8, 32], strides = [1, 1]} : vector<8x128xf32> to vector<8x32xf32>
    %36 = vector.extract_strided_slice %33 {offsets = [0, 32], sizes = [8, 32], strides = [1, 1]} : vector<8x128xf32> to vector<8x32xf32>
    %37 = vector.extract_strided_slice %34 {offsets = [0, 64], sizes = [8, 32], strides = [1, 1]} : vector<8x128xf32> to vector<8x32xf32>
    %38 = vector.extract_strided_slice %33 {offsets = [0, 96], sizes = [8, 32], strides = [1, 1]} : vector<8x128xf32> to vector<8x32xf32>
    %39 = arith.mulf %36, %22 : vector<8x32xf32>
    %40 = arith.mulf %35, %37 : vector<8x32xf32>
    %41 = arith.addf %39, %40 : vector<8x32xf32>
    %42 = math.tanh %41 : vector<8x32xf32>
    %43 = arith.mulf %38, %42 : vector<8x32xf32>
    %c2 = arith.constant 2 : index
    %c0_14 = arith.constant 0 : index
    %c0_15 = arith.constant 0 : index
    %44 = vector.load %arg2[%c2, %c0_14, %c0_15] : memref<8x8x128xf32, #tpu.memory_space<vmem>>, vector<1x8x128xf32>
    %45 = vector.shape_cast %44 : vector<1x8x128xf32> to vector<8x128xf32>
    %cst_16 = arith.constant dense<0.000000e+00> : vector<8x128xf32>
    %46 = tpu.matmul %43, %3, %cst_16 {dimension_numbers = #tpu.dot_dimension_numbers<[1], [0], [0], [1], [0, 0, 1, 1], [], []>} : vector<8x32xf32>, vector<32x128xf32>, vector<8x128xf32> -> vector<8x128xf32>
    %47 = arith.addf %45, %46 : vector<8x128xf32>
    %48 = arith.negf %47 : vector<8x128xf32>
    %49 = math.exp %48 : vector<8x128xf32>
    %cst_17 = arith.constant 1.000000e+00 : f32
    %50 = vector.broadcast %cst_17 : f32 to vector<8x128xf32>
    %51 = arith.addf %50, %49 : vector<8x128xf32>
    %52 = arith.divf %50, %51 : vector<8x128xf32>
    %53 = math.tanh %47 : vector<8x128xf32>
    %54 = vector.extract_strided_slice %52 {offsets = [0, 0], sizes = [8, 32], strides = [1, 1]} : vector<8x128xf32> to vector<8x32xf32>
    %55 = vector.extract_strided_slice %52 {offsets = [0, 32], sizes = [8, 32], strides = [1, 1]} : vector<8x128xf32> to vector<8x32xf32>
    %56 = vector.extract_strided_slice %53 {offsets = [0, 64], sizes = [8, 32], strides = [1, 1]} : vector<8x128xf32> to vector<8x32xf32>
    %57 = vector.extract_strided_slice %52 {offsets = [0, 96], sizes = [8, 32], strides = [1, 1]} : vector<8x128xf32> to vector<8x32xf32>
    %58 = arith.mulf %55, %41 : vector<8x32xf32>
    %59 = arith.mulf %54, %56 : vector<8x32xf32>
    %60 = arith.addf %58, %59 : vector<8x32xf32>
    %61 = math.tanh %60 : vector<8x32xf32>
    %62 = arith.mulf %57, %61 : vector<8x32xf32>
    %c3 = arith.constant 3 : index
    %c0_18 = arith.constant 0 : index
    %c0_19 = arith.constant 0 : index
    %63 = vector.load %arg2[%c3, %c0_18, %c0_19] : memref<8x8x128xf32, #tpu.memory_space<vmem>>, vector<1x8x128xf32>
    %64 = vector.shape_cast %63 : vector<1x8x128xf32> to vector<8x128xf32>
    %cst_20 = arith.constant dense<0.000000e+00> : vector<8x128xf32>
    %65 = tpu.matmul %62, %3, %cst_20 {dimension_numbers = #tpu.dot_dimension_numbers<[1], [0], [0], [1], [0, 0, 1, 1], [], []>} : vector<8x32xf32>, vector<32x128xf32>, vector<8x128xf32> -> vector<8x128xf32>
    %66 = arith.addf %64, %65 : vector<8x128xf32>
    %67 = arith.negf %66 : vector<8x128xf32>
    %68 = math.exp %67 : vector<8x128xf32>
    %cst_21 = arith.constant 1.000000e+00 : f32
    %69 = vector.broadcast %cst_21 : f32 to vector<8x128xf32>
    %70 = arith.addf %69, %68 : vector<8x128xf32>
    %71 = arith.divf %69, %70 : vector<8x128xf32>
    %72 = math.tanh %66 : vector<8x128xf32>
    %73 = vector.extract_strided_slice %71 {offsets = [0, 0], sizes = [8, 32], strides = [1, 1]} : vector<8x128xf32> to vector<8x32xf32>
    %74 = vector.extract_strided_slice %71 {offsets = [0, 32], sizes = [8, 32], strides = [1, 1]} : vector<8x128xf32> to vector<8x32xf32>
    %75 = vector.extract_strided_slice %72 {offsets = [0, 64], sizes = [8, 32], strides = [1, 1]} : vector<8x128xf32> to vector<8x32xf32>
    %76 = vector.extract_strided_slice %71 {offsets = [0, 96], sizes = [8, 32], strides = [1, 1]} : vector<8x128xf32> to vector<8x32xf32>
    %77 = arith.mulf %74, %60 : vector<8x32xf32>
    %78 = arith.mulf %73, %75 : vector<8x32xf32>
    %79 = arith.addf %77, %78 : vector<8x32xf32>
    %80 = math.tanh %79 : vector<8x32xf32>
    %81 = arith.mulf %76, %80 : vector<8x32xf32>
    %c4 = arith.constant 4 : index
    %c0_22 = arith.constant 0 : index
    %c0_23 = arith.constant 0 : index
    %82 = vector.load %arg2[%c4, %c0_22, %c0_23] : memref<8x8x128xf32, #tpu.memory_space<vmem>>, vector<1x8x128xf32>
    %83 = vector.shape_cast %82 : vector<1x8x128xf32> to vector<8x128xf32>
    %cst_24 = arith.constant dense<0.000000e+00> : vector<8x128xf32>
    %84 = tpu.matmul %81, %3, %cst_24 {dimension_numbers = #tpu.dot_dimension_numbers<[1], [0], [0], [1], [0, 0, 1, 1], [], []>} : vector<8x32xf32>, vector<32x128xf32>, vector<8x128xf32> -> vector<8x128xf32>
    %85 = arith.addf %83, %84 : vector<8x128xf32>
    %86 = arith.negf %85 : vector<8x128xf32>
    %87 = math.exp %86 : vector<8x128xf32>
    %cst_25 = arith.constant 1.000000e+00 : f32
    %88 = vector.broadcast %cst_25 : f32 to vector<8x128xf32>
    %89 = arith.addf %88, %87 : vector<8x128xf32>
    %90 = arith.divf %88, %89 : vector<8x128xf32>
    %91 = math.tanh %85 : vector<8x128xf32>
    %92 = vector.extract_strided_slice %90 {offsets = [0, 0], sizes = [8, 32], strides = [1, 1]} : vector<8x128xf32> to vector<8x32xf32>
    %93 = vector.extract_strided_slice %90 {offsets = [0, 32], sizes = [8, 32], strides = [1, 1]} : vector<8x128xf32> to vector<8x32xf32>
    %94 = vector.extract_strided_slice %91 {offsets = [0, 64], sizes = [8, 32], strides = [1, 1]} : vector<8x128xf32> to vector<8x32xf32>
    %95 = vector.extract_strided_slice %90 {offsets = [0, 96], sizes = [8, 32], strides = [1, 1]} : vector<8x128xf32> to vector<8x32xf32>
    %96 = arith.mulf %93, %79 : vector<8x32xf32>
    %97 = arith.mulf %92, %94 : vector<8x32xf32>
    %98 = arith.addf %96, %97 : vector<8x32xf32>
    %99 = math.tanh %98 : vector<8x32xf32>
    %100 = arith.mulf %95, %99 : vector<8x32xf32>
    %c5 = arith.constant 5 : index
    %c0_26 = arith.constant 0 : index
    %c0_27 = arith.constant 0 : index
    %101 = vector.load %arg2[%c5, %c0_26, %c0_27] : memref<8x8x128xf32, #tpu.memory_space<vmem>>, vector<1x8x128xf32>
    %102 = vector.shape_cast %101 : vector<1x8x128xf32> to vector<8x128xf32>
    %cst_28 = arith.constant dense<0.000000e+00> : vector<8x128xf32>
    %103 = tpu.matmul %100, %3, %cst_28 {dimension_numbers = #tpu.dot_dimension_numbers<[1], [0], [0], [1], [0, 0, 1, 1], [], []>} : vector<8x32xf32>, vector<32x128xf32>, vector<8x128xf32> -> vector<8x128xf32>
    %104 = arith.addf %102, %103 : vector<8x128xf32>
    %105 = arith.negf %104 : vector<8x128xf32>
    %106 = math.exp %105 : vector<8x128xf32>
    %cst_29 = arith.constant 1.000000e+00 : f32
    %107 = vector.broadcast %cst_29 : f32 to vector<8x128xf32>
    %108 = arith.addf %107, %106 : vector<8x128xf32>
    %109 = arith.divf %107, %108 : vector<8x128xf32>
    %110 = math.tanh %104 : vector<8x128xf32>
    %111 = vector.extract_strided_slice %109 {offsets = [0, 0], sizes = [8, 32], strides = [1, 1]} : vector<8x128xf32> to vector<8x32xf32>
    %112 = vector.extract_strided_slice %109 {offsets = [0, 32], sizes = [8, 32], strides = [1, 1]} : vector<8x128xf32> to vector<8x32xf32>
    %113 = vector.extract_strided_slice %110 {offsets = [0, 64], sizes = [8, 32], strides = [1, 1]} : vector<8x128xf32> to vector<8x32xf32>
    %114 = vector.extract_strided_slice %109 {offsets = [0, 96], sizes = [8, 32], strides = [1, 1]} : vector<8x128xf32> to vector<8x32xf32>
    %115 = arith.mulf %112, %98 : vector<8x32xf32>
    %116 = arith.mulf %111, %113 : vector<8x32xf32>
    %117 = arith.addf %115, %116 : vector<8x32xf32>
    %118 = math.tanh %117 : vector<8x32xf32>
    %119 = arith.mulf %114, %118 : vector<8x32xf32>
    %c6 = arith.constant 6 : index
    %c0_30 = arith.constant 0 : index
    %c0_31 = arith.constant 0 : index
    %120 = vector.load %arg2[%c6, %c0_30, %c0_31] : memref<8x8x128xf32, #tpu.memory_space<vmem>>, vector<1x8x128xf32>
    %121 = vector.shape_cast %120 : vector<1x8x128xf32> to vector<8x128xf32>
    %cst_32 = arith.constant dense<0.000000e+00> : vector<8x128xf32>
    %122 = tpu.matmul %119, %3, %cst_32 {dimension_numbers = #tpu.dot_dimension_numbers<[1], [0], [0], [1], [0, 0, 1, 1], [], []>} : vector<8x32xf32>, vector<32x128xf32>, vector<8x128xf32> -> vector<8x128xf32>
    %123 = arith.addf %121, %122 : vector<8x128xf32>
    %124 = arith.negf %123 : vector<8x128xf32>
    %125 = math.exp %124 : vector<8x128xf32>
    %cst_33 = arith.constant 1.000000e+00 : f32
    %126 = vector.broadcast %cst_33 : f32 to vector<8x128xf32>
    %127 = arith.addf %126, %125 : vector<8x128xf32>
    %128 = arith.divf %126, %127 : vector<8x128xf32>
    %129 = math.tanh %123 : vector<8x128xf32>
    %130 = vector.extract_strided_slice %128 {offsets = [0, 0], sizes = [8, 32], strides = [1, 1]} : vector<8x128xf32> to vector<8x32xf32>
    %131 = vector.extract_strided_slice %128 {offsets = [0, 32], sizes = [8, 32], strides = [1, 1]} : vector<8x128xf32> to vector<8x32xf32>
    %132 = vector.extract_strided_slice %129 {offsets = [0, 64], sizes = [8, 32], strides = [1, 1]} : vector<8x128xf32> to vector<8x32xf32>
    %133 = vector.extract_strided_slice %128 {offsets = [0, 96], sizes = [8, 32], strides = [1, 1]} : vector<8x128xf32> to vector<8x32xf32>
    %134 = arith.mulf %131, %117 : vector<8x32xf32>
    %135 = arith.mulf %130, %132 : vector<8x32xf32>
    %136 = arith.addf %134, %135 : vector<8x32xf32>
    %137 = math.tanh %136 : vector<8x32xf32>
    %138 = arith.mulf %133, %137 : vector<8x32xf32>
    %c7 = arith.constant 7 : index
    %c0_34 = arith.constant 0 : index
    %c0_35 = arith.constant 0 : index
    %139 = vector.load %arg2[%c7, %c0_34, %c0_35] : memref<8x8x128xf32, #tpu.memory_space<vmem>>, vector<1x8x128xf32>
    %140 = vector.shape_cast %139 : vector<1x8x128xf32> to vector<8x128xf32>
    %cst_36 = arith.constant dense<0.000000e+00> : vector<8x128xf32>
    %141 = tpu.matmul %138, %3, %cst_36 {dimension_numbers = #tpu.dot_dimension_numbers<[1], [0], [0], [1], [0, 0, 1, 1], [], []>} : vector<8x32xf32>, vector<32x128xf32>, vector<8x128xf32> -> vector<8x128xf32>
    %142 = arith.addf %140, %141 : vector<8x128xf32>
    %143 = arith.negf %142 : vector<8x128xf32>
    %144 = math.exp %143 : vector<8x128xf32>
    %cst_37 = arith.constant 1.000000e+00 : f32
    %145 = vector.broadcast %cst_37 : f32 to vector<8x128xf32>
    %146 = arith.addf %145, %144 : vector<8x128xf32>
    %147 = arith.divf %145, %146 : vector<8x128xf32>
    %148 = math.tanh %142 : vector<8x128xf32>
    %149 = vector.extract_strided_slice %147 {offsets = [0, 0], sizes = [8, 32], strides = [1, 1]} : vector<8x128xf32> to vector<8x32xf32>
    %150 = vector.extract_strided_slice %147 {offsets = [0, 32], sizes = [8, 32], strides = [1, 1]} : vector<8x128xf32> to vector<8x32xf32>
    %151 = vector.extract_strided_slice %148 {offsets = [0, 64], sizes = [8, 32], strides = [1, 1]} : vector<8x128xf32> to vector<8x32xf32>
    %152 = vector.extract_strided_slice %147 {offsets = [0, 96], sizes = [8, 32], strides = [1, 1]} : vector<8x128xf32> to vector<8x32xf32>
    %153 = arith.mulf %150, %136 : vector<8x32xf32>
    %154 = arith.mulf %149, %151 : vector<8x32xf32>
    %155 = arith.addf %153, %154 : vector<8x32xf32>
    %156 = math.tanh %155 : vector<8x32xf32>
    %157 = arith.mulf %152, %156 : vector<8x32xf32>
    %c0_38 = arith.constant 0 : index
    %c0_39 = arith.constant 0 : index
    %158 = vector.load %arg5[%c0_38, %c0_39] : memref<8x32xf32, #tpu.memory_space<vmem>>, vector<8x32xf32>
    tpu.vector_store %arg5[%c0_38, %c0_39], %157 {strides = array<i32>} : memref<8x32xf32, #tpu.memory_space<vmem>>, vector<8x32xf32>,
    %c0_40 = arith.constant 0 : index
    %c0_41 = arith.constant 0 : index
    %159 = vector.load %arg6[%c0_40, %c0_41] : memref<8x32xf32, #tpu.memory_space<vmem>>, vector<8x32xf32>
    tpu.vector_store %arg6[%c0_40, %c0_41], %155 {strides = array<i32>} : memref<8x32xf32, #tpu.memory_space<vmem>>, vector<8x32xf32>,
    %160 = tpu.concatenate %24, %43, %62, %81, %100, %119, %138, %157 in 1 : vector<8x32xf32>, vector<8x32xf32>, vector<8x32xf32>, vector<8x32xf32>, vector<8x32xf32>, vector<8x32xf32>, vector<8x32xf32>, vector<8x32xf32> -> vector<8x256xf32>
    %c0_42 = arith.constant 0 : index
    %c0_43 = arith.constant 0 : index
    %c0_44 = arith.constant 0 : index
    %161 = vector.load %arg4[%c0_42, %c0_43, %c0_44] : memref<1x8x256xf32, #tpu.memory_space<vmem>>, vector<1x8x256xf32>
    %162 = vector.shape_cast %161 : vector<1x8x256xf32> to vector<8x256xf32>
    %163 = vector.shape_cast %160 : vector<8x256xf32> to vector<1x8x256xf32>
    tpu.vector_store %arg4[%c0_42, %c0_43, %c0_44], %163 {strides = array<i32>} : memref<1x8x256xf32, #tpu.memory_space<vmem>>, vector<1x8x256xf32>,
    return
  }
  func.func @transform_0(%arg0: i32, %arg1: i32) -> (i32, i32, i32) {
    %c0_i32 = arith.constant 0 : i32
    %c0_i32_0 = arith.constant 0 : i32
    return %arg1, %arg0, %c0_i32 : i32, i32, i32
  }
  func.func @transform_1(%arg0: i32, %arg1: i32) -> (i32, i32) {
    %c0_i32 = arith.constant 0 : i32
    %c0_i32_0 = arith.constant 0 : i32
    %c0_i32_1 = arith.constant 0 : i32
    return %c0_i32, %c0_i32_0 : i32, i32
  }
  func.func @transform_2(%arg0: i32, %arg1: i32) -> (i32, i32, i32) {
    %c0_i32 = arith.constant 0 : i32
    %c0_i32_0 = arith.constant 0 : i32
    return %arg1, %arg0, %c0_i32 : i32, i32, i32
  }
}

</mosaic_0001>

<llo_original>
// kernel: tpu_custom_call.1
$region0: #{tpu_custom_call.1}
  #allocation0 [shape = 'u32[]', space=smem, size = 0x4, offset = 0x4, fixed_abs, tag = 'smem constant byte address 0x4 - core index']
  #allocation1 [shape = 'u32[144,128]{1,0:T(1,128)}', space=vmem, size = 0x12000, scoped, tag = 'internal scratch']
  #allocation2 [shape = 'f32[8,32]{1,0:T(8,128)}', space=vmem, size = 0x1000, scoped, tag = 'scratch operand']
  #allocation3 [shape = 'f32[8,32]{1,0:T(8,128)}', space=vmem, size = 0x1000, scoped, tag = 'scratch operand']
  %s0 = inlined_call_operand.hbm [shape: f32[8,8,128], index: 0, kind: input, shape index: {}]
  %s1 = inlined_call_operand.hbm [shape: f32[32,128], index: 1, kind: input, shape index: {}]
  %s2 = inlined_call_operand.hbm [shape: f32[1,8,256], index: 2, kind: output, shape index: {}]
  %s3 = sld [smem:[#allocation0]]
  $region30: #{tpu_custom_call.1} parent=0
    _
  %s5 = ssub.s32 1, %s3
  %s6 = scalar_select 0, %s5, %s3
  $region1: #{tpu_custom_call.1} parent=0
    #allocation4 [shape = 'u8[32768]{0}', space=vmem, size = 0x8000, scoped, tag = 'input window, operand 0, single buffered']
    #allocation5 [shape = 's32[1]{0}', space=sflag, size = 0x4, scoped, tag = 'scoped memory for tpu_custom_call.1']
    #allocation6 [shape = 's32[1]{0}', space=sflag, size = 0x4, scoped, tag = 'scoped memory for tpu_custom_call.1']
    #allocation7 [shape = 'u8[16384]{0}', space=vmem, size = 0x4000, scoped, tag = 'input window, operand 1, single buffered']
    #allocation8 [shape = 's32[1]{0}', space=sflag, size = 0x4, scoped, tag = 'scoped memory for tpu_custom_call.1']
    #allocation9 [shape = 'u8[8192]{0}', space=vmem, size = 0x2000, scoped, tag = 'output window, operand 0, single buffered']
    %7 = vsyncpa [#allocation5], 0
    %8 = vsyncpa [#allocation8], 0
    %9 = vsyncpa [#allocation6], 0
    // Predicated region
    $region2: #{tpu_custom_call.1} parent=1 // pred_check
      _
    $region3: #{tpu_custom_call.1} parent=1 // pred_check_branch
      %11 = sbr.rel (0) target = $region5
    $region4: #{tpu_custom_call.1} parent=1 // pred_region
      %s13 = ssub.s32 1024, 1024
      %14 = vsyncadd [#allocation5], %s13
      %s15 = sshll.u32 [#allocation4], 4
      %s16 = int_to_ptr.vmem [resolvable:$true] %s15
      %21 = dma.hbm_to_vmem [thread:$0]  %s0, 1024, %s16, [#allocation5], 128, 128, 8
    $region5: #{tpu_custom_call.1} parent=1 // pred_fallthru
      _
    // Predicated region
    $region6: #{tpu_custom_call.1} parent=1 // pred_check
      _
    $region7: #{tpu_custom_call.1} parent=1 // pred_check_branch
      %23 = sbr.rel (0) target = $region9
    $region8: #{tpu_custom_call.1} parent=1 // pred_region
      %s25 = ssub.s32 512, 512
      %26 = vsyncadd [#allocation8], %s25
      %s27 = sshll.u32 [#allocation7], 4
      %s28 = int_to_ptr.vmem [resolvable:$true] %s27
      %33 = dma.hbm_to_vmem [thread:$0]  %s1, 512, %s28, [#allocation8], 128, 128, 8
    $region9: #{tpu_custom_call.1} parent=1 // pred_fallthru
      _
    // Predicated region
    $region10: #{tpu_custom_call.1} parent=1 // pred_check
      _
    $region11: #{tpu_custom_call.1} parent=1 // pred_check_branch
      %35 = sbr.rel (0) target = $region13
    $region12: #{tpu_custom_call.1} parent=1 // pred_region
      %36 = dma.done [#allocation5], 1024
    $region13: #{tpu_custom_call.1} parent=1 // pred_fallthru
      _
    // Predicated region
    $region14: #{tpu_custom_call.1} parent=1 // pred_check
      _
    $region15: #{tpu_custom_call.1} parent=1 // pred_check_branch
      %38 = sbr.rel (0) target = $region17
    $region16: #{tpu_custom_call.1} parent=1 // pred_region
      %39 = dma.done [#allocation8], 512
    $region17: #{tpu_custom_call.1} parent=1 // pred_fallthru
      _
    %p40 = scmp.eq.s32.totalorder 0, 0
    // Predicated region
    $region18: #{tpu_custom_call.1} parent=1 // pred_check
      %p41 = pneg %p40
    $region19: #{tpu_custom_call.1} parent=1 // pred_check_branch
      %43 = sbr.rel (%p41) target = $region21
    $region20: #{tpu_custom_call.1} parent=1 // pred_region
      %vm44 = vcmask 261120
      %45 = vst.msk [vmem:[#allocation2] sm:$0xff] %vm44, 0.0
      %46 = vst.msk [vmem:[#allocation3] sm:$0xff] %vm44, 0.0
    $region21: #{tpu_custom_call.1} parent=1 // pred_fallthru
      _
    %v47 = vld [vmem:[#allocation7] sm:$0xff]
    %v48 = vld [vmem:[#allocation7 + $0x8] sm:$0xff]
    %v49 = vld [vmem:[#allocation7 + $0x10] sm:$0xff]
    %v50 = vld [vmem:[#allocation7 + $0x18] sm:$0xff]
    %v51 = vld [vmem:[#allocation2] sm:$0xff]
    %v52 = vld [vmem:[#allocation3] sm:$0xff]
    %v53 = vld [vmem:[#allocation4] sm:$0xff]
    %vm54 = vcmask 261120
    %v56 = vsel %vm54, %v51, 0
    %58 = vmatprep.subr.mxu0 0.0
    %59 = vmatpush1.msra.mxu0 0.0
    %60 = vmatprep.subr.mxu0 0.0
    %61 = vmatpush1.msra.mxu0 0.0
    %62 = vmatprep.subr.mxu0 0.0
    %63 = vmatpush1.msra.mxu0 0.0
    %64 = vmatprep.subr.mxu0 0.0
    %65 = vmatpush1.msra.mxu0 0.0
    %66 = vmatprep.subr.mxu0 0.0
    %67 = vmatpush1.msra.mxu0 0.0
    %68 = vmatprep.subr.mxu0 0.0
    %69 = vmatpush1.msra.mxu0 0.0
    %70 = vmatprep.subr.mxu0 0.0
    %71 = vmatpush1.msra.mxu0 0.0
    %72 = vmatprep.subr.mxu0 0.0
    %73 = vmatpush1.msra.mxu0 0.0
    %74 = vmatprep.subr.mxu0 0.0
    %75 = vmatpush1.msra.mxu0 0.0
    %76 = vmatprep.subr.mxu0 0.0
    %77 = vmatpush1.msra.mxu0 0.0
    %78 = vmatprep.subr.mxu0 0.0
    %79 = vmatpush1.msra.mxu0 0.0
    %80 = vmatprep.subr.mxu0 0.0
    %81 = vmatpush1.msra.mxu0 0.0
    %82 = vmatprep.subr.mxu0 0.0
    %83 = vmatpush1.msra.mxu0 %v50
    %84 = vmatprep.subr.mxu0 0.0
    %85 = vmatpush1.msra.mxu0 %v49
    %86 = vmatprep.subr.mxu0 0.0
    %87 = vmatpush1.msra.mxu0 %v48
    %88 = vmatprep.subr.mxu0 0.0
    %89 = vmatpush1.msra.mxu0 %v47
    %90 = vmatprep.subr.mxu0 0.0
    %91 = vmatpush2.msra.mxu0 0.0
    %92 = vmatprep.subr.mxu0 0.0
    %93 = vmatpush2.msra.mxu0 0.0
    %94 = vmatprep.subr.mxu0 0.0
    %95 = vmatpush2.msra.mxu0 0.0
    %96 = vmatprep.subr.mxu0 0.0
    %97 = vmatpush2.msra.mxu0 0.0
    %98 = vmatprep.subr.mxu0 0.0
    %99 = vmatpush2.msra.mxu0 0.0
    %100 = vmatprep.subr.mxu0 0.0
    %101 = vmatpush2.msra.mxu0 0.0
    %102 = vmatprep.subr.mxu0 0.0
    %103 = vmatpush2.msra.mxu0 0.0
    %104 = vmatprep.subr.mxu0 0.0
    %105 = vmatpush2.msra.mxu0 0.0
    %106 = vmatprep.subr.mxu0 0.0
    %107 = vmatpush2.msra.mxu0 0.0
    %108 = vmatprep.subr.mxu0 0.0
    %109 = vmatpush2.msra.mxu0 0.0
    %110 = vmatprep.subr.mxu0 0.0
    %111 = vmatpush2.msra.mxu0 0.0
    %112 = vmatprep.subr.mxu0 0.0
    %113 = vmatpush2.msra.mxu0 0.0
    %114 = vmatprep.subr.mxu0 0.0
    %115 = vmatpush2.msra.mxu0 0.0
    %116 = vmatprep.subr.mxu0 0.0
    %117 = vmatpush2.msra.mxu0 0.0
    %118 = vmatprep.subr.mxu0 0.0
    %119 = vmatpush2.msra.mxu0 0.0
    %120 = vmatprep.subr.mxu0 0.0
    %121 = vmatpush2.msra.mxu0 0.0
    %122 = vmatprep.mubr.f32.mxu0 0.0
    %123 = vmatmul.mubr.f32.gmra.mxu0 %v56
    %v124 = vpop.f32.mrf.mxu0
    %v125 = vadd.f32 0.0, %v124
    %v126 = vpop.f32.mrf.mxu0
    %127 = vdwg.mxu0
    %v128 = vadd.f32 %v53, %v125
    %v129 = vxor.u32 %v128, 2147483648
    %v130 = vmul.f32 %v129, 1.442695
    %v131 = vpow.pop %v130
    %v132 = vadd.f32 %v131, 1.0
    %v133 = vrcp.pop %v132
    %v134 = vmul.f32 1.0, %v133
    %v135 = vtanh.pop %v128
    %137 = vrot.lane.b32.xlu0 %v52, 32
    %v138 = vpop.permute.xlu0 %137
    %v140 = vmul.f32 %v134, %v138
    %142 = vrot.lane.b32.xlu0 %v135, 64
    %v143 = vpop.permute.xlu0 %142
    %v145 = vmul.f32 %v134, %v143
    %147 = vrot.lane.b32.xlu0 %v145, 32
    %v148 = vpop.permute.xlu0 %147
    %v150 = vadd.f32 %v140, %v148
    %v151 = vtanh.pop %v150
    %153 = vrot.lane.b32.xlu0 %v151, 64
    %v154 = vpop.permute.xlu0 %153
    %v156 = vmul.f32 %v134, %v154
    %s157 = scalar_lea.vmem [#allocation4], 8
    %v158 = vld [vmem:[%s157] sm:$0xff]
    %160 = vrot.lane.b32.xlu0 %v156, 32
    %v161 = vpop.permute.xlu0 %160
    %v162 = vsel %vm54, %v161, 0
    %164 = vmatprep.subr.mxu0 0.0
    %165 = vmatpush1.msra.mxu0 0.0
    %166 = vmatprep.subr.mxu0 0.0
    %167 = vmatpush1.msra.mxu0 0.0
    %168 = vmatprep.subr.mxu0 0.0
    %169 = vmatpush1.msra.mxu0 0.0
    %170 = vmatprep.subr.mxu0 0.0
    %171 = vmatpush1.msra.mxu0 0.0
    %172 = vmatprep.subr.mxu0 0.0
    %173 = vmatpush1.msra.mxu0 0.0
    %174 = vmatprep.subr.mxu0 0.0
    %175 = vmatpush1.msra.mxu0 0.0
    %176 = vmatprep.subr.mxu0 0.0
    %177 = vmatpush1.msra.mxu0 0.0
    %178 = vmatprep.subr.mxu0 0.0
    %179 = vmatpush1.msra.mxu0 0.0
    %180 = vmatprep.subr.mxu0 0.0
    %181 = vmatpush1.msra.mxu0 0.0
    %182 = vmatprep.subr.mxu0 0.0
    %183 = vmatpush1.msra.mxu0 0.0
    %184 = vmatprep.subr.mxu0 0.0
    %185 = vmatpush1.msra.mxu0 0.0
    %186 = vmatprep.subr.mxu0 0.0
    %187 = vmatpush1.msra.mxu0 0.0
    %188 = vmatprep.subr.mxu0 0.0
    %189 = vmatpush1.msra.mxu0 %v50
    %190 = vmatprep.subr.mxu0 0.0
    %191 = vmatpush1.msra.mxu0 %v49
    %192 = vmatprep.subr.mxu0 0.0
    %193 = vmatpush1.msra.mxu0 %v48
    %194 = vmatprep.subr.mxu0 0.0
    %195 = vmatpush1.msra.mxu0 %v47
    %196 = vmatprep.subr.mxu0 0.0
    %197 = vmatpush2.msra.mxu0 0.0
    %198 = vmatprep.subr.mxu0 0.0
    %199 = vmatpush2.msra.mxu0 0.0
    %200 = vmatprep.subr.mxu0 0.0
    %201 = vmatpush2.msra.mxu0 0.0
    %202 = vmatprep.subr.mxu0 0.0
    %203 = vmatpush2.msra.mxu0 0.0
    %204 = vmatprep.subr.mxu0 0.0
    %205 = vmatpush2.msra.mxu0 0.0
    %206 = vmatprep.subr.mxu0 0.0
    %207 = vmatpush2.msra.mxu0 0.0
    %208 = vmatprep.subr.mxu0 0.0
    %209 = vmatpush2.msra.mxu0 0.0
    %210 = vmatprep.subr.mxu0 0.0
    %211 = vmatpush2.msra.mxu0 0.0
    %212 = vmatprep.subr.mxu0 0.0
    %213 = vmatpush2.msra.mxu0 0.0
    %214 = vmatprep.subr.mxu0 0.0
    %215 = vmatpush2.msra.mxu0 0.0
    %216 = vmatprep.subr.mxu0 0.0
    %217 = vmatpush2.msra.mxu0 0.0
    %218 = vmatprep.subr.mxu0 0.0
    %219 = vmatpush2.msra.mxu0 0.0
    %220 = vmatprep.subr.mxu0 0.0
    %221 = vmatpush2.msra.mxu0 0.0
    %222 = vmatprep.subr.mxu0 0.0
    %223 = vmatpush2.msra.mxu0 0.0
    %224 = vmatprep.subr.mxu0 0.0
    %225 = vmatpush2.msra.mxu0 0.0
    %226 = vmatprep.subr.mxu0 0.0
    %227 = vmatpush2.msra.mxu0 0.0
    %228 = vmatprep.mubr.f32.mxu0 0.0
    %229 = vmatmul.mubr.f32.gmra.mxu0 %v162
    %v230 = vpop.f32.mrf.mxu0
    %v231 = vadd.f32 0.0, %v230
    %v232 = vpop.f32.mrf.mxu0
    %233 = vdwg.mxu0
    %v234 = vadd.f32 %v158, %v231
    %v235 = vxor.u32 %v234, 2147483648
    %v236 = vmul.f32 %v235, 1.442695
    %v237 = vpow.pop %v236
    %v238 = vadd.f32 %v237, 1.0
    %v239 = vrcp.pop %v238
    %v240 = vmul.f32 1.0, %v239
    %v241 = vtanh.pop %v234
    %v242 = vmul.f32 %v240, %v150
    %244 = vrot.lane.b32.xlu0 %v241, 64
    %v245 = vpop.permute.xlu0 %244
    %v247 = vmul.f32 %v240, %v245
    %249 = vrot.lane.b32.xlu0 %v247, 32
    %v250 = vpop.permute.xlu0 %249
    %v252 = vadd.f32 %v242, %v250
    %v253 = vtanh.pop %v252
    %255 = vrot.lane.b32.xlu0 %v253, 64
    %v256 = vpop.permute.xlu0 %255
    %v258 = vmul.f32 %v240, %v256
    %s259 = scalar_lea.vmem [#allocation4], 16
    %v260 = vld [vmem:[%s259] sm:$0xff]
    %262 = vrot.lane.b32.xlu0 %v258, 32
    %v263 = vpop.permute.xlu0 %262
    %v264 = vsel %vm54, %v263, 0
    %266 = vmatprep.subr.mxu0 0.0
    %267 = vmatpush1.msra.mxu0 0.0
    %268 = vmatprep.subr.mxu0 0.0
    %269 = vmatpush1.msra.mxu0 0.0
    %270 = vmatprep.subr.mxu0 0.0
    %271 = vmatpush1.msra.mxu0 0.0
    %272 = vmatprep.subr.mxu0 0.0
    %273 = vmatpush1.msra.mxu0 0.0
    %274 = vmatprep.subr.mxu0 0.0
    %275 = vmatpush1.msra.mxu0 0.0
    %276 = vmatprep.subr.mxu0 0.0
    %277 = vmatpush1.msra.mxu0 0.0
    %278 = vmatprep.subr.mxu0 0.0
    %279 = vmatpush1.msra.mxu0 0.0
    %280 = vmatprep.subr.mxu0 0.0
    %281 = vmatpush1.msra.mxu0 0.0
    %282 = vmatprep.subr.mxu0 0.0
    %283 = vmatpush1.msra.mxu0 0.0
    %284 = vmatprep.subr.mxu0 0.0
    %285 = vmatpush1.msra.mxu0 0.0
    %286 = vmatprep.subr.mxu0 0.0
    %287 = vmatpush1.msra.mxu0 0.0
    %288 = vmatprep.subr.mxu0 0.0
    %289 = vmatpush1.msra.mxu0 0.0
    %290 = vmatprep.subr.mxu0 0.0
    %291 = vmatpush1.msra.mxu0 %v50
    %292 = vmatprep.subr.mxu0 0.0
    %293 = vmatpush1.msra.mxu0 %v49
    %294 = vmatprep.subr.mxu0 0.0
    %295 = vmatpush1.msra.mxu0 %v48
    %296 = vmatprep.subr.mxu0 0.0
    %297 = vmatpush1.msra.mxu0 %v47
    %298 = vmatprep.subr.mxu0 0.0
    %299 = vmatpush2.msra.mxu0 0.0
    %300 = vmatprep.subr.mxu0 0.0
    %301 = vmatpush2.msra.mxu0 0.0
    %302 = vmatprep.subr.mxu0 0.0
    %303 = vmatpush2.msra.mxu0 0.0
    %304 = vmatprep.subr.mxu0 0.0
    %305 = vmatpush2.msra.mxu0 0.0
    %306 = vmatprep.subr.mxu0 0.0
    %307 = vmatpush2.msra.mxu0 0.0
    %308 = vmatprep.subr.mxu0 0.0
    %309 = vmatpush2.msra.mxu0 0.0
    %310 = vmatprep.subr.mxu0 0.0
    %311 = vmatpush2.msra.mxu0 0.0
    %312 = vmatprep.subr.mxu0 0.0
    %313 = vmatpush2.msra.mxu0 0.0
    %314 = vmatprep.subr.mxu0 0.0
    %315 = vmatpush2.msra.mxu0 0.0
    %316 = vmatprep.subr.mxu0 0.0
    %317 = vmatpush2.msra.mxu0 0.0
    %318 = vmatprep.subr.mxu0 0.0
    %319 = vmatpush2.msra.mxu0 0.0
    %320 = vmatprep.subr.mxu0 0.0
    %321 = vmatpush2.msra.mxu0 0.0
    %322 = vmatprep.subr.mxu0 0.0
    %323 = vmatpush2.msra.mxu0 0.0
    %324 = vmatprep.subr.mxu0 0.0
    %325 = vmatpush2.msra.mxu0 0.0
    %326 = vmatprep.subr.mxu0 0.0
    %327 = vmatpush2.msra.mxu0 0.0
    %328 = vmatprep.subr.mxu0 0.0
    %329 = vmatpush2.msra.mxu0 0.0
    %330 = vmatprep.mubr.f32.mxu0 0.0
    %331 = vmatmul.mubr.f32.gmra.mxu0 %v264
    %v332 = vpop.f32.mrf.mxu0
    %v333 = vadd.f32 0.0, %v332
    %v334 = vpop.f32.mrf.mxu0
    %335 = vdwg.mxu0
    %v336 = vadd.f32 %v260, %v333
    %v337 = vxor.u32 %v336, 2147483648
    %v338 = vmul.f32 %v337, 1.442695
    %v339 = vpow.pop %v338
    %v340 = vadd.f32 %v339, 1.0
    %v341 = vrcp.pop %v340
    %v342 = vmul.f32 1.0, %v341
    %v343 = vtanh.pop %v336
    %v344 = vmul.f32 %v342, %v252
    %346 = vrot.lane.b32.xlu0 %v343, 64
    %v347 = vpop.permute.xlu0 %346
    %v349 = vmul.f32 %v342, %v347
    %351 = vrot.lane.b32.xlu0 %v349, 32
    %v352 = vpop.permute.xlu0 %351
    %v354 = vadd.f32 %v344, %v352
    %v355 = vtanh.pop %v354
    %357 = vrot.lane.b32.xlu0 %v355, 64
    %v358 = vpop.permute.xlu0 %357
    %v360 = vmul.f32 %v342, %v358
    %s361 = scalar_lea.vmem [#allocation4], 24
    %v362 = vld [vmem:[%s361] sm:$0xff]
    %364 = vrot.lane.b32.xlu0 %v360, 32
    %v365 = vpop.permute.xlu0 %364
    %v366 = vsel %vm54, %v365, 0
    %368 = vmatprep.subr.mxu0 0.0
    %369 = vmatpush1.msra.mxu0 0.0
    %370 = vmatprep.subr.mxu0 0.0
    %371 = vmatpush1.msra.mxu0 0.0
    %372 = vmatprep.subr.mxu0 0.0
    %373 = vmatpush1.msra.mxu0 0.0
    %374 = vmatprep.subr.mxu0 0.0
    %375 = vmatpush1.msra.mxu0 0.0
    %376 = vmatprep.subr.mxu0 0.0
    %377 = vmatpush1.msra.mxu0 0.0
    %378 = vmatprep.subr.mxu0 0.0
    %379 = vmatpush1.msra.mxu0 0.0
    %380 = vmatprep.subr.mxu0 0.0
    %381 = vmatpush1.msra.mxu0 0.0
    %382 = vmatprep.subr.mxu0 0.0
    %383 = vmatpush1.msra.mxu0 0.0
    %384 = vmatprep.subr.mxu0 0.0
    %385 = vmatpush1.msra.mxu0 0.0
    %386 = vmatprep.subr.mxu0 0.0
    %387 = vmatpush1.msra.mxu0 0.0
    %388 = vmatprep.subr.mxu0 0.0
    %389 = vmatpush1.msra.mxu0 0.0
    %390 = vmatprep.subr.mxu0 0.0
    %391 = vmatpush1.msra.mxu0 0.0
    %392 = vmatprep.subr.mxu0 0.0
    %393 = vmatpush1.msra.mxu0 %v50
    %394 = vmatprep.subr.mxu0 0.0
    %395 = vmatpush1.msra.mxu0 %v49
    %396 = vmatprep.subr.mxu0 0.0
    %397 = vmatpush1.msra.mxu0 %v48
    %398 = vmatprep.subr.mxu0 0.0
    %399 = vmatpush1.msra.mxu0 %v47
    %400 = vmatprep.subr.mxu0 0.0
    %401 = vmatpush2.msra.mxu0 0.0
    %402 = vmatprep.subr.mxu0 0.0
    %403 = vmatpush2.msra.mxu0 0.0
    %404 = vmatprep.subr.mxu0 0.0
    %405 = vmatpush2.msra.mxu0 0.0
    %406 = vmatprep.subr.mxu0 0.0
    %407 = vmatpush2.msra.mxu0 0.0
    %408 = vmatprep.subr.mxu0 0.0
    %409 = vmatpush2.msra.mxu0 0.0
    %410 = vmatprep.subr.mxu0 0.0
    %411 = vmatpush2.msra.mxu0 0.0
    %412 = vmatprep.subr.mxu0 0.0
    %413 = vmatpush2.msra.mxu0 0.0
    %414 = vmatprep.subr.mxu0 0.0
    %415 = vmatpush2.msra.mxu0 0.0
    %416 = vmatprep.subr.mxu0 0.0
    %417 = vmatpush2.msra.mxu0 0.0
    %418 = vmatprep.subr.mxu0 0.0
    %419 = vmatpush2.msra.mxu0 0.0
    %420 = vmatprep.subr.mxu0 0.0
    %421 = vmatpush2.msra.mxu0 0.0
    %422 = vmatprep.subr.mxu0 0.0
    %423 = vmatpush2.msra.mxu0 0.0
    %424 = vmatprep.subr.mxu0 0.0
    %425 = vmatpush2.msra.mxu0 0.0
    %426 = vmatprep.subr.mxu0 0.0
    %427 = vmatpush2.msra.mxu0 0.0
    %428 = vmatprep.subr.mxu0 0.0
    %429 = vmatpush2.msra.mxu0 0.0
    %430 = vmatprep.subr.mxu0 0.0
    %431 = vmatpush2.msra.mxu0 0.0
    %432 = vmatprep.mubr.f32.mxu0 0.0
    %433 = vmatmul.mubr.f32.gmra.mxu0 %v366
    %v434 = vpop.f32.mrf.mxu0
    %v435 = vadd.f32 0.0, %v434
    %v436 = vpop.f32.mrf.mxu0
    %437 = vdwg.mxu0
    %v438 = vadd.f32 %v362, %v435
    %v439 = vxor.u32 %v438, 2147483648
    %v440 = vmul.f32 %v439, 1.442695
    %v441 = vpow.pop %v440
    %v442 = vadd.f32 %v441, 1.0
    %v443 = vrcp.pop %v442
    %v444 = vmul.f32 1.0, %v443
    %v445 = vtanh.pop %v438
    %v446 = vmul.f32 %v444, %v354
    %448 = vrot.lane.b32.xlu0 %v445, 64
    %v449 = vpop.permute.xlu0 %448
    %v451 = vmul.f32 %v444, %v449
    %453 = vrot.lane.b32.xlu0 %v451, 32
    %v454 = vpop.permute.xlu0 %453
    %v456 = vadd.f32 %v446, %v454
    %v457 = vtanh.pop %v456
    %459 = vrot.lane.b32.xlu0 %v457, 64
    %v460 = vpop.permute.xlu0 %459
    %v462 = vmul.f32 %v444, %v460
    %s463 = scalar_lea.vmem [#allocation4], 32
    %v464 = vld [vmem:[%s463] sm:$0xff]
    %466 = vrot.lane.b32.xlu0 %v462, 32
    %v467 = vpop.permute.xlu0 %466
    %v468 = vsel %vm54, %v467, 0
    %470 = vmatprep.subr.mxu0 0.0
    %471 = vmatpush1.msra.mxu0 0.0
    %472 = vmatprep.subr.mxu0 0.0
    %473 = vmatpush1.msra.mxu0 0.0
    %474 = vmatprep.subr.mxu0 0.0
    %475 = vmatpush1.msra.mxu0 0.0
    %476 = vmatprep.subr.mxu0 0.0
    %477 = vmatpush1.msra.mxu0 0.0
    %478 = vmatprep.subr.mxu0 0.0
    %479 = vmatpush1.msra.mxu0 0.0
    %480 = vmatprep.subr.mxu0 0.0
    %481 = vmatpush1.msra.mxu0 0.0
    %482 = vmatprep.subr.mxu0 0.0
    %483 = vmatpush1.msra.mxu0 0.0
    %484 = vmatprep.subr.mxu0 0.0
    %485 = vmatpush1.msra.mxu0 0.0
    %486 = vmatprep.subr.mxu0 0.0
    %487 = vmatpush1.msra.mxu0 0.0
    %488 = vmatprep.subr.mxu0 0.0
    %489 = vmatpush1.msra.mxu0 0.0
    %490 = vmatprep.subr.mxu0 0.0
    %491 = vmatpush1.msra.mxu0 0.0
    %492 = vmatprep.subr.mxu0 0.0
    %493 = vmatpush1.msra.mxu0 0.0
    %494 = vmatprep.subr.mxu0 0.0
    %495 = vmatpush1.msra.mxu0 %v50
    %496 = vmatprep.subr.mxu0 0.0
    %497 = vmatpush1.msra.mxu0 %v49
    %498 = vmatprep.subr.mxu0 0.0
    %499 = vmatpush1.msra.mxu0 %v48
    %500 = vmatprep.subr.mxu0 0.0
    %501 = vmatpush1.msra.mxu0 %v47
    %502 = vmatprep.subr.mxu0 0.0
    %503 = vmatpush2.msra.mxu0 0.0
    %504 = vmatprep.subr.mxu0 0.0
    %505 = vmatpush2.msra.mxu0 0.0
    %506 = vmatprep.subr.mxu0 0.0
    %507 = vmatpush2.msra.mxu0 0.0
    %508 = vmatprep.subr.mxu0 0.0
    %509 = vmatpush2.msra.mxu0 0.0
    %510 = vmatprep.subr.mxu0 0.0
    %511 = vmatpush2.msra.mxu0 0.0
    %512 = vmatprep.subr.mxu0 0.0
    %513 = vmatpush2.msra.mxu0 0.0
    %514 = vmatprep.subr.mxu0 0.0
    %515 = vmatpush2.msra.mxu0 0.0
    %516 = vmatprep.subr.mxu0 0.0
    %517 = vmatpush2.msra.mxu0 0.0
    %518 = vmatprep.subr.mxu0 0.0
    %519 = vmatpush2.msra.mxu0 0.0
    %520 = vmatprep.subr.mxu0 0.0
    %521 = vmatpush2.msra.mxu0 0.0
    %522 = vmatprep.subr.mxu0 0.0
    %523 = vmatpush2.msra.mxu0 0.0
    %524 = vmatprep.subr.mxu0 0.0
    %525 = vmatpush2.msra.mxu0 0.0
    %526 = vmatprep.subr.mxu0 0.0
    %527 = vmatpush2.msra.mxu0 0.0
    %528 = vmatprep.subr.mxu0 0.0
    %529 = vmatpush2.msra.mxu0 0.0
    %530 = vmatprep.subr.mxu0 0.0
    %531 = vmatpush2.msra.mxu0 0.0
    %532 = vmatprep.subr.mxu0 0.0
    %533 = vmatpush2.msra.mxu0 0.0
    %534 = vmatprep.mubr.f32.mxu0 0.0
    %535 = vmatmul.mubr.f32.gmra.mxu0 %v468
    %v536 = vpop.f32.mrf.mxu0
    %v537 = vadd.f32 0.0, %v536
    %v538 = vpop.f32.mrf.mxu0
    %539 = vdwg.mxu0
    %v540 = vadd.f32 %v464, %v537
    %v541 = vxor.u32 %v540, 2147483648
    %v542 = vmul.f32 %v541, 1.442695
    %v543 = vpow.pop %v542
    %v544 = vadd.f32 %v543, 1.0
    %v545 = vrcp.pop %v544
    %v546 = vmul.f32 1.0, %v545
    %v547 = vtanh.pop %v540
    %v548 = vmul.f32 %v546, %v456
    %550 = vrot.lane.b32.xlu0 %v547, 64
    %v551 = vpop.permute.xlu0 %550
    %v553 = vmul.f32 %v546, %v551
    %555 = vrot.lane.b32.xlu0 %v553, 32
    %v556 = vpop.permute.xlu0 %555
    %v558 = vadd.f32 %v548, %v556
    %v559 = vtanh.pop %v558
    %561 = vrot.lane.b32.xlu0 %v559, 64
    %v562 = vpop.permute.xlu0 %561
    %v564 = vmul.f32 %v546, %v562
    %s565 = scalar_lea.vmem [#allocation4], 40
    %v566 = vld [vmem:[%s565] sm:$0xff]
    %568 = vrot.lane.b32.xlu0 %v564, 32
    %v569 = vpop.permute.xlu0 %568
    %v570 = vsel %vm54, %v569, 0
    %572 = vmatprep.subr.mxu0 0.0
    %573 = vmatpush1.msra.mxu0 0.0
    %574 = vmatprep.subr.mxu0 0.0
    %575 = vmatpush1.msra.mxu0 0.0
    %576 = vmatprep.subr.mxu0 0.0
    %577 = vmatpush1.msra.mxu0 0.0
    %578 = vmatprep.subr.mxu0 0.0
    %579 = vmatpush1.msra.mxu0 0.0
    %580 = vmatprep.subr.mxu0 0.0
    %581 = vmatpush1.msra.mxu0 0.0
    %582 = vmatprep.subr.mxu0 0.0
    %583 = vmatpush1.msra.mxu0 0.0
    %584 = vmatprep.subr.mxu0 0.0
    %585 = vmatpush1.msra.mxu0 0.0
    %586 = vmatprep.subr.mxu0 0.0
    %587 = vmatpush1.msra.mxu0 0.0
    %588 = vmatprep.subr.mxu0 0.0
    %589 = vmatpush1.msra.mxu0 0.0
    %590 = vmatprep.subr.mxu0 0.0
    %591 = vmatpush1.msra.mxu0 0.0
    %592 = vmatprep.subr.mxu0 0.0
    %593 = vmatpush1.msra.mxu0 0.0
    %594 = vmatprep.subr.mxu0 0.0
    %595 = vmatpush1.msra.mxu0 0.0
    %596 = vmatprep.subr.mxu0 0.0
    %597 = vmatpush1.msra.mxu0 %v50
    %598 = vmatprep.subr.mxu0 0.0
    %599 = vmatpush1.msra.mxu0 %v49
    %600 = vmatprep.subr.mxu0 0.0
    %601 = vmatpush1.msra.mxu0 %v48
    %602 = vmatprep.subr.mxu0 0.0
    %603 = vmatpush1.msra.mxu0 %v47
    %604 = vmatprep.subr.mxu0 0.0
    %605 = vmatpush2.msra.mxu0 0.0
    %606 = vmatprep.subr.mxu0 0.0
    %607 = vmatpush2.msra.mxu0 0.0
    %608 = vmatprep.subr.mxu0 0.0
    %609 = vmatpush2.msra.mxu0 0.0
    %610 = vmatprep.subr.mxu0 0.0
    %611 = vmatpush2.msra.mxu0 0.0
    %612 = vmatprep.subr.mxu0 0.0
    %613 = vmatpush2.msra.mxu0 0.0
    %614 = vmatprep.subr.mxu0 0.0
    %615 = vmatpush2.msra.mxu0 0.0
    %616 = vmatprep.subr.mxu0 0.0
    %617 = vmatpush2.msra.mxu0 0.0
    %618 = vmatprep.subr.mxu0 0.0
    %619 = vmatpush2.msra.mxu0 0.0
    %620 = vmatprep.subr.mxu0 0.0
    %621 = vmatpush2.msra.mxu0 0.0
    %622 = vmatprep.subr.mxu0 0.0
    %623 = vmatpush2.msra.mxu0 0.0
    %624 = vmatprep.subr.mxu0 0.0
    %625 = vmatpush2.msra.mxu0 0.0
    %626 = vmatprep.subr.mxu0 0.0
    %627 = vmatpush2.msra.mxu0 0.0
    %628 = vmatprep.subr.mxu0 0.0
    %629 = vmatpush2.msra.mxu0 0.0
    %630 = vmatprep.subr.mxu0 0.0
    %631 = vmatpush2.msra.mxu0 0.0
    %632 = vmatprep.subr.mxu0 0.0
    %633 = vmatpush2.msra.mxu0 0.0
    %634 = vmatprep.subr.mxu0 0.0
    %635 = vmatpush2.msra.mxu0 0.0
    %636 = vmatprep.mubr.f32.mxu0 0.0
    %637 = vmatmul.mubr.f32.gmra.mxu0 %v570
    %v638 = vpop.f32.mrf.mxu0
    %v639 = vadd.f32 0.0, %v638
    %v640 = vpop.f32.mrf.mxu0
    %641 = vdwg.mxu0
    %v642 = vadd.f32 %v566, %v639
    %v643 = vxor.u32 %v642, 2147483648
    %v644 = vmul.f32 %v643, 1.442695
    %v645 = vpow.pop %v644
    %v646 = vadd.f32 %v645, 1.0
    %v647 = vrcp.pop %v646
    %v648 = vmul.f32 1.0, %v647
    %v649 = vtanh.pop %v642
    %v650 = vmul.f32 %v648, %v558
    %652 = vrot.lane.b32.xlu0 %v649, 64
    %v653 = vpop.permute.xlu0 %652
    %v655 = vmul.f32 %v648, %v653
    %657 = vrot.lane.b32.xlu0 %v655, 32
    %v658 = vpop.permute.xlu0 %657
    %v660 = vadd.f32 %v650, %v658
    %v661 = vtanh.pop %v660
    %663 = vrot.lane.b32.xlu0 %v661, 64
    %v664 = vpop.permute.xlu0 %663
    %v666 = vmul.f32 %v648, %v664
    %s667 = scalar_lea.vmem [#allocation4], 48
    %v668 = vld [vmem:[%s667] sm:$0xff]
    %670 = vrot.lane.b32.xlu0 %v666, 32
    %v671 = vpop.permute.xlu0 %670
    %v672 = vsel %vm54, %v671, 0
    %674 = vmatprep.subr.mxu0 0.0
    %675 = vmatpush1.msra.mxu0 0.0
    %676 = vmatprep.subr.mxu0 0.0
    %677 = vmatpush1.msra.mxu0 0.0
    %678 = vmatprep.subr.mxu0 0.0
    %679 = vmatpush1.msra.mxu0 0.0
    %680 = vmatprep.subr.mxu0 0.0
    %681 = vmatpush1.msra.mxu0 0.0
    %682 = vmatprep.subr.mxu0 0.0
    %683 = vmatpush1.msra.mxu0 0.0
    %684 = vmatprep.subr.mxu0 0.0
    %685 = vmatpush1.msra.mxu0 0.0
    %686 = vmatprep.subr.mxu0 0.0
    %687 = vmatpush1.msra.mxu0 0.0
    %688 = vmatprep.subr.mxu0 0.0
    %689 = vmatpush1.msra.mxu0 0.0
    %690 = vmatprep.subr.mxu0 0.0
    %691 = vmatpush1.msra.mxu0 0.0
    %692 = vmatprep.subr.mxu0 0.0
    %693 = vmatpush1.msra.mxu0 0.0
    %694 = vmatprep.subr.mxu0 0.0
    %695 = vmatpush1.msra.mxu0 0.0
    %696 = vmatprep.subr.mxu0 0.0
    %697 = vmatpush1.msra.mxu0 0.0
    %698 = vmatprep.subr.mxu0 0.0
    %699 = vmatpush1.msra.mxu0 %v50
    %700 = vmatprep.subr.mxu0 0.0
    %701 = vmatpush1.msra.mxu0 %v49
    %702 = vmatprep.subr.mxu0 0.0
    %703 = vmatpush1.msra.mxu0 %v48
    %704 = vmatprep.subr.mxu0 0.0
    %705 = vmatpush1.msra.mxu0 %v47
    %706 = vmatprep.subr.mxu0 0.0
    %707 = vmatpush2.msra.mxu0 0.0
    %708 = vmatprep.subr.mxu0 0.0
    %709 = vmatpush2.msra.mxu0 0.0
    %710 = vmatprep.subr.mxu0 0.0
    %711 = vmatpush2.msra.mxu0 0.0
    %712 = vmatprep.subr.mxu0 0.0
    %713 = vmatpush2.msra.mxu0 0.0
    %714 = vmatprep.subr.mxu0 0.0
    %715 = vmatpush2.msra.mxu0 0.0
    %716 = vmatprep.subr.mxu0 0.0
    %717 = vmatpush2.msra.mxu0 0.0
    %718 = vmatprep.subr.mxu0 0.0
    %719 = vmatpush2.msra.mxu0 0.0
    %720 = vmatprep.subr.mxu0 0.0
    %721 = vmatpush2.msra.mxu0 0.0
    %722 = vmatprep.subr.mxu0 0.0
    %723 = vmatpush2.msra.mxu0 0.0
    %724 = vmatprep.subr.mxu0 0.0
    %725 = vmatpush2.msra.mxu0 0.0
    %726 = vmatprep.subr.mxu0 0.0
    %727 = vmatpush2.msra.mxu0 0.0
    %728 = vmatprep.subr.mxu0 0.0
    %729 = vmatpush2.msra.mxu0 0.0
    %730 = vmatprep.subr.mxu0 0.0
    %731 = vmatpush2.msra.mxu0 0.0
    %732 = vmatprep.subr.mxu0 0.0
    %733 = vmatpush2.msra.mxu0 0.0
    %734 = vmatprep.subr.mxu0 0.0
    %735 = vmatpush2.msra.mxu0 0.0
    %736 = vmatprep.subr.mxu0 0.0
    %737 = vmatpush2.msra.mxu0 0.0
    %738 = vmatprep.mubr.f32.mxu0 0.0
    %739 = vmatmul.mubr.f32.gmra.mxu0 %v672
    %v740 = vpop.f32.mrf.mxu0
    %v741 = vadd.f32 0.0, %v740
    %v742 = vpop.f32.mrf.mxu0
    %743 = vdwg.mxu0
    %v744 = vadd.f32 %v668, %v741
    %v745 = vxor.u32 %v744, 2147483648
    %v746 = vmul.f32 %v745, 1.442695
    %v747 = vpow.pop %v746
    %v748 = vadd.f32 %v747, 1.0
    %v749 = vrcp.pop %v748
    %v750 = vmul.f32 1.0, %v749
    %v751 = vtanh.pop %v744
    %v752 = vmul.f32 %v750, %v660
    %754 = vrot.lane.b32.xlu0 %v751, 64
    %v755 = vpop.permute.xlu0 %754
    %v757 = vmul.f32 %v750, %v755
    %759 = vrot.lane.b32.xlu0 %v757, 32
    %v760 = vpop.permute.xlu0 %759
    %v762 = vadd.f32 %v752, %v760
    %v763 = vtanh.pop %v762
    %765 = vrot.lane.b32.xlu0 %v763, 64
    %v766 = vpop.permute.xlu0 %765
    %v768 = vmul.f32 %v750, %v766
    %s769 = scalar_lea.vmem [#allocation4], 56
    %v770 = vld [vmem:[%s769] sm:$0xff]
    %772 = vrot.lane.b32.xlu0 %v768, 32
    %v773 = vpop.permute.xlu0 %772
    %v774 = vsel %vm54, %v773, 0
    %776 = vmatprep.subr.mxu0 0.0
    %777 = vmatpush1.msra.mxu0 0.0
    %778 = vmatprep.subr.mxu0 0.0
    %779 = vmatpush1.msra.mxu0 0.0
    %780 = vmatprep.subr.mxu0 0.0
    %781 = vmatpush1.msra.mxu0 0.0
    %782 = vmatprep.subr.mxu0 0.0
    %783 = vmatpush1.msra.mxu0 0.0
    %784 = vmatprep.subr.mxu0 0.0
    %785 = vmatpush1.msra.mxu0 0.0
    %786 = vmatprep.subr.mxu0 0.0
    %787 = vmatpush1.msra.mxu0 0.0
    %788 = vmatprep.subr.mxu0 0.0
    %789 = vmatpush1.msra.mxu0 0.0
    %790 = vmatprep.subr.mxu0 0.0
    %791 = vmatpush1.msra.mxu0 0.0
    %792 = vmatprep.subr.mxu0 0.0
    %793 = vmatpush1.msra.mxu0 0.0
    %794 = vmatprep.subr.mxu0 0.0
    %795 = vmatpush1.msra.mxu0 0.0
    %796 = vmatprep.subr.mxu0 0.0
    %797 = vmatpush1.msra.mxu0 0.0
    %798 = vmatprep.subr.mxu0 0.0
    %799 = vmatpush1.msra.mxu0 0.0
    %800 = vmatprep.subr.mxu0 0.0
    %801 = vmatpush1.msra.mxu0 %v50
    %802 = vmatprep.subr.mxu0 0.0
    %803 = vmatpush1.msra.mxu0 %v49
    %804 = vmatprep.subr.mxu0 0.0
    %805 = vmatpush1.msra.mxu0 %v48
    %806 = vmatprep.subr.mxu0 0.0
    %807 = vmatpush1.msra.mxu0 %v47
    %808 = vmatprep.subr.mxu0 0.0
    %809 = vmatpush2.msra.mxu0 0.0
    %810 = vmatprep.subr.mxu0 0.0
    %811 = vmatpush2.msra.mxu0 0.0
    %812 = vmatprep.subr.mxu0 0.0
    %813 = vmatpush2.msra.mxu0 0.0
    %814 = vmatprep.subr.mxu0 0.0
    %815 = vmatpush2.msra.mxu0 0.0
    %816 = vmatprep.subr.mxu0 0.0
    %817 = vmatpush2.msra.mxu0 0.0
    %818 = vmatprep.subr.mxu0 0.0
    %819 = vmatpush2.msra.mxu0 0.0
    %820 = vmatprep.subr.mxu0 0.0
    %821 = vmatpush2.msra.mxu0 0.0
    %822 = vmatprep.subr.mxu0 0.0
    %823 = vmatpush2.msra.mxu0 0.0
    %824 = vmatprep.subr.mxu0 0.0
    %825 = vmatpush2.msra.mxu0 0.0
    %826 = vmatprep.subr.mxu0 0.0
    %827 = vmatpush2.msra.mxu0 0.0
    %828 = vmatprep.subr.mxu0 0.0
    %829 = vmatpush2.msra.mxu0 0.0
    %830 = vmatprep.subr.mxu0 0.0
    %831 = vmatpush2.msra.mxu0 0.0
    %832 = vmatprep.subr.mxu0 0.0
    %833 = vmatpush2.msra.mxu0 0.0
    %834 = vmatprep.subr.mxu0 0.0
    %835 = vmatpush2.msra.mxu0 0.0
    %836 = vmatprep.subr.mxu0 0.0
    %837 = vmatpush2.msra.mxu0 0.0
    %838 = vmatprep.subr.mxu0 0.0
    %839 = vmatpush2.msra.mxu0 0.0
    %840 = vmatprep.mubr.f32.mxu0 0.0
    %841 = vmatmul.mubr.f32.gmra.mxu0 %v774
    %v842 = vpop.f32.mrf.mxu0
    %v843 = vadd.f32 0.0, %v842
    %v844 = vpop.f32.mrf.mxu0
    %845 = vdwg.mxu0
    %v846 = vadd.f32 %v770, %v843
    %v847 = vxor.u32 %v846, 2147483648
    %v848 = vmul.f32 %v847, 1.442695
    %v849 = vpow.pop %v848
    %v850 = vadd.f32 %v849, 1.0
    %v851 = vrcp.pop %v850
    %v852 = vmul.f32 1.0, %v851
    %v853 = vtanh.pop %v846
    %v854 = vmul.f32 %v852, %v762
    %856 = vrot.lane.b32.xlu0 %v853, 64
    %v857 = vpop.permute.xlu0 %856
    %v859 = vmul.f32 %v852, %v857
    %861 = vrot.lane.b32.xlu0 %v859, 32
    %v862 = vpop.permute.xlu0 %861
    %v864 = vadd.f32 %v854, %v862
    %v865 = vtanh.pop %v864
    %867 = vrot.lane.b32.xlu0 %v865, 64
    %v868 = vpop.permute.xlu0 %867
    %v870 = vmul.f32 %v852, %v868
    %872 = vrot.lane.b32.xlu0 %v870, 32
    %v873 = vpop.permute.xlu0 %872
    %875 = vst.msk [vmem:[#allocation2] sm:$0xff] %vm54, %v873
    %877 = vrot.lane.b32.xlu0 %v864, 96
    %v878 = vpop.permute.xlu0 %877
    %880 = vst.msk [vmem:[#allocation3] sm:$0xff] %vm54, %v878
    %882 = vrot.lane.b32.xlu0 %v258, 64
    %v883 = vpop.permute.xlu0 %882
    %885 = vrot.lane.b32.xlu0 %v360, 96
    %v886 = vpop.permute.xlu0 %885
    %889 = vrot.lane.b32.xlu0 %v666, 64
    %v890 = vpop.permute.xlu0 %889
    %892 = vrot.lane.b32.xlu0 %v768, 96
    %v893 = vpop.permute.xlu0 %892
    %v895 = vsel %vm54, %v161, %v883
    %vm896 = vcmask 523264
    %v897 = vsel %vm896, %v895, %v886
    %vm898 = vcmask 785408
    %v899 = vsel %vm898, %v897, %v462
    %v900 = vsel %vm54, %v569, %v890
    %v901 = vsel %vm896, %v900, %v893
    %v902 = vsel %vm898, %v901, %v870
    %903 = vst [vmem:[#allocation9] sm:$0xff] %v899
    %904 = vst [vmem:[#allocation9 + $0x8] sm:$0xff] %v902
    // Predicated region
    $region22: #{tpu_custom_call.1} parent=1 // pred_check
      _
    $region23: #{tpu_custom_call.1} parent=1 // pred_check_branch
      %906 = sbr.rel (0) target = $region25
    $region24: #{tpu_custom_call.1} parent=1 // pred_region
      %s908 = ssub.s32 256, 256
      %909 = vsyncadd [#allocation6], %s908
      %s911 = sshll.u32 [#allocation9], 4
      %s912 = int_to_ptr.vmem [resolvable:$true] %s911
      %914 = dma.vmem_to_hbm [thread:$0]  %s912, 256, %s2, [#allocation6]
    $region25: #{tpu_custom_call.1} parent=1 // pred_fallthru
      _
    // Predicated region
    $region26: #{tpu_custom_call.1} parent=1 // pred_check
      _
    $region27: #{tpu_custom_call.1} parent=1 // pred_check_branch
      %916 = sbr.rel (0) target = $region29
    $region28: #{tpu_custom_call.1} parent=1 // pred_region
      %917 = dma.done [#allocation6], 256
    $region29: #{tpu_custom_call.1} parent=1 // pred_fallthru
      _
    %918 = vsyncpa [#allocation5], 1
    %919 = vsyncpa [#allocation8], 1
    %920 = vsyncpa [#allocation6], 1

</llo_original>
